<compile_context>
chip_gen: v5e
topology: v5e:2x2
jax: 0.10.0
libtpu: 0.0.40
codegen_flags: <defaults>
</compile_context>

<pallas_src>
import jax
import jax.numpy as jnp
from jax.experimental import pallas as pl
from jax.experimental.pallas import tpu as pltpu


# Packed-slab layout (rows, cols) inside the single (8, 16) f32 operand:
#   [0:5, 0:3 ]  x.T        (5,3)
#   [0:4, 3:8 ]  W1         (4,5)
#   [0:4, 8:9 ]  b1 column  (4,1)
#   [0:3, 9:13]  W2.T       (3,4)
#   [5:6, 9:13]  b2 row     (1,4)
def _model_kernel(p_ref, o_ref):
    xT  = p_ref[0:5, 0:3]     # (5, 3)
    w1  = p_ref[0:4, 3:8]     # (4, 5)
    b1c = p_ref[0:4, 8:9]     # (4, 1)
    w2t = p_ref[0:3, 9:13]    # (3, 4)
    b2r = p_ref[5:6, 9:13]    # (1, 4)

    # h1t[k, i] = sum_j W1[k, j] * x[i, j] + b1[k]   -> (4, 3)
    # (plain (4,5)x(5,3) contraction -- no transpose needed inside the kernel)
    h1t = jnp.dot(w1, xT, preferred_element_type=jnp.float32) + b1c

    # h3[k, m] = sum_t h1t[k, t] * W2[m, t] + b2[m]  -> (4, 4)
    h3 = jnp.dot(h1t, w2t, preferred_element_type=jnp.float32) + b2r

    o_ref[...] = h3.astype(o_ref.dtype)


def model_forward(x, w1, b1, w2, b2):
    # Pack everything into one slab -> one input DMA.
    p = jnp.zeros((8, 16), jnp.float32)
    p = p.at[0:5, 0:3].set(x.T.astype(jnp.float32))
    p = p.at[0:4, 3:8].set(w1.astype(jnp.float32))
    p = p.at[0:4, 8:9].set(b1.astype(jnp.float32)[:, None])
    p = p.at[0:3, 9:13].set(w2.T.astype(jnp.float32))
    p = p.at[5:6, 9:13].set(b2.astype(jnp.float32)[None, :])

    vmem = pl.BlockSpec(memory_space=pltpu.MemorySpace.VMEM)
    h3 = pl.pallas_call(
        _model_kernel,
        out_shape=jax.ShapeDtypeStruct((4, 4), jnp.float32),
        in_specs=[vmem],
        out_specs=vmem,
    )(p)

    # expand to (2,4,3) -> Linear2 -> (2,4,4) -> cat dim 0 -> (4,4,4);
    # all leading slices are identical, so this is a pure broadcast (XLA-side).
    return jnp.broadcast_to(h3[None, :, :], (4, 4, 4))


def _reference(x, w1, b1, w2, b2):
    h1 = x @ w1.T + b1                 # (3,4)
    h1t = h1.T                         # (4,3)
    h2 = jnp.broadcast_to(h1t[None], (2, 4, 3))
    h3 = h2 @ w2.T + b2                # (2,4,4)
    return jnp.concatenate((h3, h3), axis=0)


if __name__ == "__main__":
    key = jax.random.PRNGKey(0)
    kx, k1w, k1b, k2w, k2b = jax.random.split(key, 5)

    x = jax.random.normal(kx, (3, 5), dtype=jnp.float32)

    # Deterministic nn.Linear-style init (uniform(-1/sqrt(fan_in), 1/sqrt(fan_in)))
    bound1 = 1.0 / jnp.sqrt(5.0)
    w1 = jax.random.uniform(k1w, (4, 5), jnp.float32, -bound1, bound1)
    b1 = jax.random.uniform(k1b, (4,), jnp.float32, -bound1, bound1)
    bound2 = 1.0 / jnp.sqrt(3.0)
    w2 = jax.random.uniform(k2w, (4, 3), jnp.float32, -bound2, bound2)
    b2 = jax.random.uniform(k2b, (4,), jnp.float32, -bound2, bound2)

    out = model_forward(x, w1, b1, w2, b2)
    out = jax.block_until_ready(out)

    ref = _reference(x, w1, b1, w2, b2)
    assert out.shape == (4, 4, 4), out.shape
    assert jnp.allclose(out, ref, atol=1e-5, rtol=1e-5), "mismatch vs reference"

    # TODO(synk): the original PyTorch forward is not executable (illegal
    # expand of a (3,4) to (2,5,4)); semantics above follow the documented
    # minimal repair (transpose before layers2, broadcast+concat of identical
    # slices).

    print("KERNEL_OK")
</pallas_src>

<mosaic_0001>
module attributes {stable_mosaic.version = 11 : i64} {
  func.func @_model_kernel(%arg0: memref<8x16xf32, #tpu.memory_space<vmem>>, %arg1: memref<4x4xf32, #tpu.memory_space<vmem>>) attributes {dimension_semantics = [], scalar_prefetch = 0 : i64, scratch_operands = 0 : i64, tpu.core_type = #tpu.core_type<tc>} {
    %c0 = arith.constant 0 : index
    %c0_0 = arith.constant 0 : index
    %0 = vector.load %arg0[%c0, %c0_0] : memref<8x16xf32, #tpu.memory_space<vmem>>, vector<5x3xf32>
    %c0_1 = arith.constant 0 : index
    %c3 = arith.constant 3 : index
    %1 = vector.load %arg0[%c0_1, %c3] : memref<8x16xf32, #tpu.memory_space<vmem>>, vector<4x5xf32>
    %c0_2 = arith.constant 0 : index
    %c8 = arith.constant 8 : index
    %2 = vector.load %arg0[%c0_2, %c8] : memref<8x16xf32, #tpu.memory_space<vmem>>, vector<4x1xf32>
    %c0_3 = arith.constant 0 : index
    %c9 = arith.constant 9 : index
    %3 = vector.load %arg0[%c0_3, %c9] : memref<8x16xf32, #tpu.memory_space<vmem>>, vector<3x4xf32>
    %c5 = arith.constant 5 : index
    %c9_4 = arith.constant 9 : index
    %4 = vector.load %arg0[%c5, %c9_4] : memref<8x16xf32, #tpu.memory_space<vmem>>, vector<1x4xf32>
    %cst = arith.constant dense<0.000000e+00> : vector<4x3xf32>
    %5 = tpu.matmul %1, %0, %cst {dimension_numbers = #tpu.dot_dimension_numbers<[1], [0], [0], [1], [0, 0, 1, 1], [], []>} : vector<4x5xf32>, vector<5x3xf32>, vector<4x3xf32> -> vector<4x3xf32>
    %6 = vector.broadcast %2 : vector<4x1xf32> to vector<4x3xf32>
    %7 = arith.addf %5, %6 : vector<4x3xf32>
    %cst_5 = arith.constant dense<0.000000e+00> : vector<4x4xf32>
    %8 = tpu.matmul %7, %3, %cst_5 {dimension_numbers = #tpu.dot_dimension_numbers<[1], [0], [0], [1], [0, 0, 1, 1], [], []>} : vector<4x3xf32>, vector<3x4xf32>, vector<4x4xf32> -> vector<4x4xf32>
    %9 = vector.broadcast %4 : vector<1x4xf32> to vector<4x4xf32>
    %10 = arith.addf %8, %9 : vector<4x4xf32>
    %c0_6 = arith.constant 0 : index
    %c0_7 = arith.constant 0 : index
    %11 = vector.load %arg1[%c0_6, %c0_7] : memref<4x4xf32, #tpu.memory_space<vmem>>, vector<4x4xf32>
    tpu.vector_store %arg1[%c0_6, %c0_7], %10 {strides = array<i32>} : memref<4x4xf32, #tpu.memory_space<vmem>>, vector<4x4xf32>,
    return
  }
}

</mosaic_0001>

<llo_original>
// kernel: tpu_custom_call.1
$region0: #{tpu_custom_call.1}
  #allocation0 [shape = 'u32[]', space=smem, size = 0x4, offset = 0x4, fixed_abs, tag = 'smem constant byte address 0x4 - core index']
  #allocation1 [shape = 'u32[72,128]{1,0:T(1,128)}', space=vmem, size = 0x9000, scoped, tag = 'internal scratch']
  %s0 = inlined_call_operand.hbm [shape: f32[8,16], index: 0, kind: input, shape index: {}]
  %s1 = inlined_call_operand.hbm [shape: f32[4,4], index: 1, kind: output, shape index: {}]
  %s2 = sld [smem:[#allocation0]]
  $region18: #{tpu_custom_call.1} parent=0
    _
  %s4 = ssub.s32 1, %s2
  %s5 = scalar_select 0, %s4, %s2
  $region1: #{tpu_custom_call.1} parent=0
    #allocation2 [shape = 'u8[4096]{0}', space=vmem, size = 0x1000, scoped, tag = 'input window, operand 0, single buffered']
    #allocation3 [shape = 's32[1]{0}', space=sflag, size = 0x4, scoped, tag = 'scoped memory for tpu_custom_call.1']
    #allocation4 [shape = 's32[1]{0}', space=sflag, size = 0x4, scoped, tag = 'scoped memory for tpu_custom_call.1']
    #allocation5 [shape = 'u8[2048]{0}', space=vmem, size = 0x800, scoped, tag = 'output window, operand 0, single buffered']
    %6 = vsyncpa [#allocation3], 0
    %7 = vsyncpa [#allocation4], 0
    // Predicated region
    $region2: #{tpu_custom_call.1} parent=1 // pred_check
      _
    $region3: #{tpu_custom_call.1} parent=1 // pred_check_branch
      %9 = sbr.rel (0) target = $region5
    $region4: #{tpu_custom_call.1} parent=1 // pred_region
      %11 = vsyncadd [#allocation3], 0
      %s13 = sshll.u32 %s0, 4
      %s14 = int_to_ptr.hbm [resolvable:$true] %s13
      %s15 = sshll.u32 [#allocation2], 4
      %s16 = int_to_ptr.vmem [resolvable:$true] %s15
      %18 = dma.hbm_to_vmem [thread:$0]  %s14, 128, %s16, [#allocation3]
    $region5: #{tpu_custom_call.1} parent=1 // pred_fallthru
      _
    // Predicated region
    $region6: #{tpu_custom_call.1} parent=1 // pred_check
      _
    $region7: #{tpu_custom_call.1} parent=1 // pred_check_branch
      %20 = sbr.rel (0) target = $region9
    $region8: #{tpu_custom_call.1} parent=1 // pred_region
      %22 = dma.done [#allocation3], 128
    $region9: #{tpu_custom_call.1} parent=1 // pred_fallthru
      _
    %v23 = vld [vmem:[#allocation2] sm:$0x1f]
    %v24 = vld [vmem:[#allocation2] sm:$0xf]
    %v25 = vld [vmem:[#allocation2] sm:$0x7]
    %v26 = vld [vmem:[#allocation2 + $0x5] sm:$0x1]
    %28 = vset.pattern.permute.xlu0 8
    %29 = vperm.xlu0 %28, %v24
    %v30 = vpop.permute.xlu0 %29
    %32 = vrot.lane.b32.xlu0 %v24, 125
    %v33 = vpop.permute.xlu0 %32
    %vm34 = vcmask 39936
    %v35 = vsel %vm34, %v33, 0
    %vm37 = vcmask 1044480
    %v39 = vsel %vm37, %v23, 0
    %41 = vmatpush.msra.mxu0 0.0
    %42 = vmatpush.msra.mxu0 0.0
    %43 = vmatpush.msra.mxu0 0.0
    %44 = vmatpush.msra.mxu0 0.0
    %45 = vmatpush.msra.mxu0 0.0
    %46 = vmatpush.msra.mxu0 0.0
    %47 = vmatpush.msra.mxu0 0.0
    %48 = vmatpush.msra.mxu0 0.0
    %49 = vmatpush.msra.mxu0 0.0
    %50 = vmatpush.msra.mxu0 0.0
    %51 = vmatpush.msra.mxu0 0.0
    %52 = vmatpush.msra.mxu0 0.0
    %53 = vmatpush.msra.mxu0 0.0
    %54 = vmatpush.msra.mxu0 0.0
    %55 = vmatpush.msra.mxu0 0.0
    %56 = vmatpush.msra.mxu0 %v39
    %57 = vmatmul.f32.gmra.mxu0 %v35
    %v58 = vpop.f32.mrf.mxu0
    %v59 = vadd.f32 %v30, %v58
    %60 = vdwg.mxu0
    %v61 = vperm.slane %v26, 0
    %63 = vrot.lane.b32.xlu0 %v25, 119
    %v64 = vpop.permute.xlu0 %63
    %66 = vrot.lane.b32.xlu0 %v61, 119
    %v67 = vpop.permute.xlu0 %66
    %vm69 = vcmask 23552
    %v71 = vsel %vm69, %v59, 0
    %vm73 = vcmask 1042432
    %v74 = vsel %vm73, %v64, 0
    %76 = vmatpush.msra.mxu0 0.0
    %77 = vmatpush.msra.mxu0 0.0
    %78 = vmatpush.msra.mxu0 0.0
    %79 = vmatpush.msra.mxu0 0.0
    %80 = vmatpush.msra.mxu0 0.0
    %81 = vmatpush.msra.mxu0 0.0
    %82 = vmatpush.msra.mxu0 0.0
    %83 = vmatpush.msra.mxu0 0.0
    %84 = vmatpush.msra.mxu0 0.0
    %85 = vmatpush.msra.mxu0 0.0
    %86 = vmatpush.msra.mxu0 0.0
    %87 = vmatpush.msra.mxu0 0.0
    %88 = vmatpush.msra.mxu0 0.0
    %89 = vmatpush.msra.mxu0 0.0
    %90 = vmatpush.msra.mxu0 0.0
    %91 = vmatpush.msra.mxu0 %v74
    %92 = vmatmul.f32.gmra.mxu0 %v71
    %v93 = vpop.f32.mrf.mxu0
    %v94 = vadd.f32 %v67, %v93
    %95 = vdwg.mxu0
    %vm96 = vcmask 27648
    %97 = vst.msk [vmem:[#allocation5] sm:$0xf] %vm96, %v94
    // Predicated region
    $region10: #{tpu_custom_call.1} parent=1 // pred_check
      _
    $region11: #{tpu_custom_call.1} parent=1 // pred_check_branch
      %99 = sbr.rel (0) target = $region13
    $region12: #{tpu_custom_call.1} parent=1 // pred_region
      %101 = vsyncadd [#allocation4], 0
      %s103 = sshll.u32 [#allocation5], 4
      %s104 = int_to_ptr.vmem [resolvable:$true] %s103
      %s105 = sshll.u32 %s1, 4
      %s106 = int_to_ptr.hbm [resolvable:$true] %s105
      %108 = dma.vmem_to_hbm [thread:$0]  %s104, 64, %s106, [#allocation4]
    $region13: #{tpu_custom_call.1} parent=1 // pred_fallthru
      _
    // Predicated region
    $region14: #{tpu_custom_call.1} parent=1 // pred_check
      _
    $region15: #{tpu_custom_call.1} parent=1 // pred_check_branch
      %110 = sbr.rel (0) target = $region17
    $region16: #{tpu_custom_call.1} parent=1 // pred_region
      %112 = dma.done [#allocation4], 64
    $region17: #{tpu_custom_call.1} parent=1 // pred_fallthru
      _
    %113 = vsyncpa [#allocation3], 1
    %114 = vsyncpa [#allocation4], 1

</llo_original>
